<compile_context>
chip_gen: v7x
topology: tpu7x:2x2x1
jax: 0.10.0
libtpu: 0.0.40
codegen_flags: <defaults>
</compile_context>

<pallas_src>
import jax
import jax.numpy as jnp
from jax.experimental import pallas as pl
from jax.experimental.pallas import tpu as pltpu

BN_EPS = 1e-5
IN_DIM = 10
HID = 128
OUT_DIM = 2

# Packed small-parameter layout: one lane-dense (3 + OUT_DIM, 128) f32 block.
#   row 0          : BatchNorm gamma                  (128,)
#   row 1          : BatchNorm beta                   (128,)
#   rows 2..3      : fc2 weight, transposed (w2.T)    (2, 128)
#   row 4          : fc2 bias in lanes 0..1, zero-padded to 128
PACK_ROWS = 3 + OUT_DIM


def dqn_kernel(x_ref, w1_ref, pp_ref, o_ref):
    # fc1 (bias omitted -- it cancels exactly under train-mode BatchNorm).
    x = x_ref[...]                                                     # (B, 10)
    h = jnp.dot(x, w1_ref[...], preferred_element_type=jnp.float32)    # (B, 128)

    pp = pp_ref[...]                                                   # (5, 128)
    gamma = pp[0:1, :]                                                 # (1, 128)
    beta = pp[1:2, :]                                                  # (1, 128)
    w2t = pp[2:2 + OUT_DIM, :]                                         # (2, 128)

    # BatchNorm1d, training mode: batch mean and biased batch variance
    # (two-pass form; gamma folded into the rsqrt scale).
    # Note: degenerate batches (B=1 or a constant feature) give var=0 and a
    # rsqrt(eps) blow-up; this matches PyTorch numerically.
    mean = jnp.mean(h, axis=0, keepdims=True)                          # (1, 128)
    c = h - mean
    var = jnp.mean(c * c, axis=0, keepdims=True)                       # (1, 128)
    scale = gamma * jax.lax.rsqrt(var + BN_EPS)                        # (1, 128)

    # Normalize + ReLU.
    hr = jnp.maximum(c * scale + beta, 0.0)                            # (B, 128)

    # fc2 computed feature-major: (2,128) contracted with (B,128) -> (2, B).
    logits_t = jax.lax.dot_general(
        w2t, hr, (((1,), (1,)), ((), ())),
        preferred_element_type=jnp.float32)                            # (2, B)

    # 2-class softmax == sigmoid of the logit difference (exact).
    b2_row = pp[PACK_ROWS - 1:PACK_ROWS, :]
    db = b2_row[:, 0:1] - b2_row[:, 1:2]                               # (1, 1)
    d = (logits_t[0:1, :] - logits_t[1:2, :]) + db                     # (1, B)
    p0 = 1.0 / (1.0 + jnp.exp(-d))                                     # (1, B)
    o_ref[...] = jnp.concatenate([p0, 1.0 - p0], axis=0)               # (2, B)


def pack_small_params(gamma, beta, w2, b2):
    """Pack gamma (1,128), beta (1,128), w2 (128,2), b2 (1,2) into one (5,128)
    f32 block.  Do this once per parameter update, not per forward call."""
    b2_pad = jnp.zeros((1, HID), jnp.float32).at[:, :OUT_DIM].set(b2)
    return jnp.concatenate([gamma, beta, w2.T, b2_pad], axis=0)


def dqn_forward(x, w1, packed):
    B = x.shape[0]
    vmem = pl.BlockSpec(memory_space=pltpu.MemorySpace.VMEM)
    itemsize = 4
    cost = pl.CostEstimate(
        flops=2 * B * (IN_DIM * HID + HID * OUT_DIM),
        transcendentals=B,                                   # one exp per row
        bytes_accessed=(x.size + w1.size + packed.size + OUT_DIM * B) * itemsize,
    )
    out_t = pl.pallas_call(
        dqn_kernel,
        out_shape=jax.ShapeDtypeStruct((OUT_DIM, B), jnp.float32),
        in_specs=[vmem, vmem, vmem],
        out_specs=vmem,
        cost_estimate=cost,
    )(x, w1, packed)
    # Back to the module's (B, OUT_DIM) layout.
    return out_t.T


def init_params(key):
    # Deterministic init mimicking PyTorch Linear defaults (U(+/- 1/sqrt(fan_in))).
    # Weights are stored pre-transposed as (in_features, out_features).
    k1, k2, k3, k4 = jax.random.split(key, 4)
    bound1 = 1.0 / jnp.sqrt(float(IN_DIM))
    w1 = jax.random.uniform(k1, (IN_DIM, HID), jnp.float32, -bound1, bound1)
    # b1 is kept only for the reference check; the kernel omits it because it
    # cancels exactly under train-mode BatchNorm.
    b1 = jax.random.uniform(k2, (1, HID), jnp.float32, -bound1, bound1)
    gamma = jnp.ones((1, HID), jnp.float32)    # BatchNorm1d weight init
    beta = jnp.zeros((1, HID), jnp.float32)    # BatchNorm1d bias init
    bound2 = 1.0 / jnp.sqrt(float(HID))
    w2 = jax.random.uniform(k3, (HID, OUT_DIM), jnp.float32, -bound2, bound2)
    b2 = jax.random.uniform(k4, (1, OUT_DIM), jnp.float32, -bound2, bound2)
    return w1, b1, gamma, beta, w2, b2


def dqn_reference(x, params):
    # Pure-JAX reference faithful to the PyTorch module (fc1 bias included,
    # plain softmax).
    w1, b1, gamma, beta, w2, b2 = params
    h = x @ w1 + b1
    mean = jnp.mean(h, axis=0, keepdims=True)
    var = jnp.mean((h - mean) ** 2, axis=0, keepdims=True)
    hn = (h - mean) / jnp.sqrt(var + BN_EPS) * gamma + beta
    hr = jnp.maximum(hn, 0.0)
    logits = hr @ w2 + b2
    return jax.nn.softmax(logits, axis=-1)


if __name__ == "__main__":
    key = jax.random.PRNGKey(0)
    kx, kp = jax.random.split(key)
    batch = 8
    x = jax.random.normal(kx, (batch, IN_DIM), jnp.float32)
    params = init_params(kp)
    w1, b1, gamma, beta, w2, b2 = params

    # Pack the small parameters once (per parameter update), not per forward.
    packed = pack_small_params(gamma, beta, w2, b2)

    out = dqn_forward(x, w1, packed)
    out = jax.block_until_ready(out)

    ref = dqn_reference(x, params)
    assert out.shape == (batch, OUT_DIM)
    assert jnp.allclose(out, ref, atol=1e-5, rtol=1e-5)
    assert jnp.allclose(jnp.sum(out, axis=-1), 1.0, atol=1e-5)

    print("KERNEL_OK")
</pallas_src>

<mosaic_0001>
module attributes {stable_mosaic.version = 11 : i64} {
  func.func @dqn_kernel(%arg0: memref<8x10xf32, #tpu.memory_space<vmem>>, %arg1: memref<10x128xf32, #tpu.memory_space<vmem>>, %arg2: memref<5x128xf32, #tpu.memory_space<vmem>>, %arg3: memref<2x8xf32, #tpu.memory_space<vmem>>) attributes {dimension_semantics = [], scalar_prefetch = 0 : i64, scratch_operands = 0 : i64, tpu.core_type = #tpu.core_type<tc>} {
    %c0 = arith.constant 0 : index
    %c0_0 = arith.constant 0 : index
    %0 = vector.load %arg0[%c0, %c0_0] : memref<8x10xf32, #tpu.memory_space<vmem>>, vector<8x10xf32>
    %c0_1 = arith.constant 0 : index
    %c0_2 = arith.constant 0 : index
    %1 = vector.load %arg1[%c0_1, %c0_2] : memref<10x128xf32, #tpu.memory_space<vmem>>, vector<10x128xf32>
    %cst = arith.constant dense<0.000000e+00> : vector<8x128xf32>
    %2 = tpu.matmul %0, %1, %cst {dimension_numbers = #tpu.dot_dimension_numbers<[1], [0], [0], [1], [0, 0, 1, 1], [], []>} : vector<8x10xf32>, vector<10x128xf32>, vector<8x128xf32> -> vector<8x128xf32>
    %c0_3 = arith.constant 0 : index
    %c0_4 = arith.constant 0 : index
    %3 = vector.load %arg2[%c0_3, %c0_4] : memref<5x128xf32, #tpu.memory_space<vmem>>, vector<5x128xf32>
    %4 = vector.extract_strided_slice %3 {offsets = [0, 0], sizes = [1, 128], strides = [1, 1]} : vector<5x128xf32> to vector<1x128xf32>
    %5 = vector.extract_strided_slice %3 {offsets = [1, 0], sizes = [1, 128], strides = [1, 1]} : vector<5x128xf32> to vector<1x128xf32>
    %6 = vector.extract_strided_slice %3 {offsets = [2, 0], sizes = [2, 128], strides = [1, 1]} : vector<5x128xf32> to vector<2x128xf32>
    %cst_5 = arith.constant dense<0.000000e+00> : vector<128xf32>
    %7 = vector.multi_reduction <add>, %2, %cst_5 [0] : vector<8x128xf32> to vector<128xf32>
    %8 = vector.shape_cast %7 : vector<128xf32> to vector<1x128xf32>
    %cst_6 = arith.constant 8.000000e+00 : f32
    %9 = vector.broadcast %cst_6 : f32 to vector<1x128xf32>
    %10 = arith.divf %8, %9 : vector<1x128xf32>
    %11 = vector.broadcast %10 : vector<1x128xf32> to vector<8x128xf32>
    %12 = arith.subf %2, %11 : vector<8x128xf32>
    %13 = arith.mulf %12, %12 : vector<8x128xf32>
    %cst_7 = arith.constant dense<0.000000e+00> : vector<128xf32>
    %14 = vector.multi_reduction <add>, %13, %cst_7 [0] : vector<8x128xf32> to vector<128xf32>
    %15 = vector.shape_cast %14 : vector<128xf32> to vector<1x128xf32>
    %cst_8 = arith.constant 8.000000e+00 : f32
    %16 = vector.broadcast %cst_8 : f32 to vector<1x128xf32>
    %17 = arith.divf %15, %16 : vector<1x128xf32>
    %cst_9 = arith.constant 9.99999974E-6 : f32
    %18 = vector.broadcast %cst_9 : f32 to vector<1x128xf32>
    %19 = arith.addf %17, %18 : vector<1x128xf32>
    %20 = math.rsqrt %19 : vector<1x128xf32>
    %21 = arith.mulf %4, %20 : vector<1x128xf32>
    %22 = vector.broadcast %21 : vector<1x128xf32> to vector<8x128xf32>
    %23 = arith.mulf %12, %22 : vector<8x128xf32>
    %24 = vector.broadcast %5 : vector<1x128xf32> to vector<8x128xf32>
    %25 = arith.addf %23, %24 : vector<8x128xf32>
    %cst_10 = arith.constant 0.000000e+00 : f32
    %26 = vector.broadcast %cst_10 : f32 to vector<8x128xf32>
    %27 = arith.maximumf %25, %26 : vector<8x128xf32>
    %cst_11 = arith.constant dense<0.000000e+00> : vector<2x8xf32>
    %28 = tpu.matmul %6, %27, %cst_11 {dimension_numbers = #tpu.dot_dimension_numbers<[1], [1], [0], [0], [0, 0, 1, 0], [], []>} : vector<2x128xf32>, vector<8x128xf32>, vector<2x8xf32> -> vector<2x8xf32>
    %29 = vector.extract_strided_slice %3 {offsets = [4, 0], sizes = [1, 128], strides = [1, 1]} : vector<5x128xf32> to vector<1x128xf32>
    %30 = vector.extract_strided_slice %29 {offsets = [0, 0], sizes = [1, 1], strides = [1, 1]} : vector<1x128xf32> to vector<1x1xf32>
    %31 = vector.extract_strided_slice %29 {offsets = [0, 1], sizes = [1, 1], strides = [1, 1]} : vector<1x128xf32> to vector<1x1xf32>
    %32 = arith.subf %30, %31 : vector<1x1xf32>
    %33 = vector.extract_strided_slice %28 {offsets = [0, 0], sizes = [1, 8], strides = [1, 1]} : vector<2x8xf32> to vector<1x8xf32>
    %34 = vector.extract_strided_slice %28 {offsets = [1, 0], sizes = [1, 8], strides = [1, 1]} : vector<2x8xf32> to vector<1x8xf32>
    %35 = arith.subf %33, %34 : vector<1x8xf32>
    %36 = vector.broadcast %32 : vector<1x1xf32> to vector<1x8xf32>
    %37 = arith.addf %35, %36 : vector<1x8xf32>
    %cst_12 = arith.constant 0.000000e+00 : f32
    %38 = vector.broadcast %cst_12 : f32 to vector<1x8xf32>
    %39 = arith.subf %38, %37 : vector<1x8xf32>
    %40 = math.exp %39 : vector<1x8xf32>
    %cst_13 = arith.constant 1.000000e+00 : f32
    %41 = vector.broadcast %cst_13 : f32 to vector<1x8xf32>
    %42 = arith.addf %41, %40 : vector<1x8xf32>
    %cst_14 = arith.constant 1.000000e+00 : f32
    %43 = vector.broadcast %cst_14 : f32 to vector<1x8xf32>
    %44 = arith.divf %43, %42 : vector<1x8xf32>
    %cst_15 = arith.constant 1.000000e+00 : f32
    %45 = vector.broadcast %cst_15 : f32 to vector<1x8xf32>
    %46 = arith.subf %45, %44 : vector<1x8xf32>
    %47 = tpu.concatenate %44, %46 in 0 : vector<1x8xf32>, vector<1x8xf32> -> vector<2x8xf32>
    %c0_16 = arith.constant 0 : index
    %c0_17 = arith.constant 0 : index
    %48 = vector.load %arg3[%c0_16, %c0_17] : memref<2x8xf32, #tpu.memory_space<vmem>>, vector<2x8xf32>
    tpu.vector_store %arg3[%c0_16, %c0_17], %47 {strides = array<i32>} : memref<2x8xf32, #tpu.memory_space<vmem>>, vector<2x8xf32>,
    return
  }
}

</mosaic_0001>

<llo_original>
// kernel: tpu_custom_call.1
$region0: #{tpu_custom_call.1}
  #allocation0 [shape = 'u32[]', space=smem, size = 0x4, offset = 0x4, fixed_abs, tag = 'smem constant byte address 0x4 - core index']
  #allocation1 [shape = 'u32[144,128]{1,0:T(1,128)}', space=vmem, size = 0x12000, scoped, tag = 'internal scratch']
  %s0 = inlined_call_operand.hbm [shape: f32[8,10], index: 0, kind: input, shape index: {}]
  %s1 = inlined_call_operand.hbm [shape: f32[10,128], index: 1, kind: input, shape index: {}]
  %s2 = inlined_call_operand.hbm [shape: f32[5,128], index: 2, kind: input, shape index: {}]
  %s3 = inlined_call_operand.hbm [shape: f32[2,8], index: 3, kind: output, shape index: {}]
  %s4 = sld [smem:[#allocation0]]
  $region34: #{tpu_custom_call.1} parent=0
    _
  %s6 = ssub.s32 1, %s4
  %s7 = scalar_select 0, %s6, %s4
  $region1: #{tpu_custom_call.1} parent=0
    #allocation2 [shape = 'u8[4096]{0}', space=vmem, size = 0x1000, scoped, tag = 'input window, operand 0, single buffered']
    #allocation3 [shape = 's32[1]{0}', space=sflag, size = 0x4, scoped, tag = 'scoped memory for tpu_custom_call.1']
    #allocation4 [shape = 's32[1]{0}', space=sflag, size = 0x4, scoped, tag = 'scoped memory for tpu_custom_call.1']
    #allocation5 [shape = 'u8[8192]{0}', space=vmem, size = 0x2000, scoped, tag = 'input window, operand 1, single buffered']
    #allocation6 [shape = 's32[1]{0}', space=sflag, size = 0x4, scoped, tag = 'scoped memory for tpu_custom_call.1']
    #allocation7 [shape = 'u8[4096]{0}', space=vmem, size = 0x1000, scoped, tag = 'input window, operand 2, single buffered']
    #allocation8 [shape = 'u8[1024]{0}', space=vmem, size = 0x400, scoped, tag = 'output window, operand 0, single buffered']
    %8 = vsyncpa [#allocation3], 0
    %9 = vsyncpa [#allocation6], 0
    %10 = vsyncpa [#allocation4], 0
    // Predicated region
    $region2: #{tpu_custom_call.1} parent=1 // pred_check
      _
    $region3: #{tpu_custom_call.1} parent=1 // pred_check_branch
      %12 = sbr.rel (0) target = $region5
    $region4: #{tpu_custom_call.1} parent=1 // pred_region
      %s14 = ssub.s32 128, 128
      %15 = vsyncadd [#allocation3], %s14
      %s17 = sshll.u32 [#allocation2], 4
      %s18 = int_to_ptr.vmem [resolvable:$true] %s17
      %20 = dma.hbm_to_vmem [thread:$0]  %s0, 128, %s18, [#allocation3]
    $region5: #{tpu_custom_call.1} parent=1 // pred_fallthru
      _
    // Predicated region
    $region6: #{tpu_custom_call.1} parent=1 // pred_check
      _
    $region7: #{tpu_custom_call.1} parent=1 // pred_check_branch
      %22 = sbr.rel (0) target = $region9
    $region8: #{tpu_custom_call.1} parent=1 // pred_region
      %s24 = ssub.s32 256, 256
      %25 = vsyncadd [#allocation6], %s24
      %s26 = sshll.u32 [#allocation5], 4
      %s27 = int_to_ptr.vmem [resolvable:$true] %s26
      %32 = dma.hbm_to_vmem [thread:$0]  %s1, 256, %s27, [#allocation6], 128, 128, 8
    $region9: #{tpu_custom_call.1} parent=1 // pred_fallthru
      _
    // Predicated region
    $region10: #{tpu_custom_call.1} parent=1 // pred_check
      _
    $region11: #{tpu_custom_call.1} parent=1 // pred_check_branch
      %34 = sbr.rel (0) target = $region13
    $region12: #{tpu_custom_call.1} parent=1 // pred_region
      %s36 = ssub.s32 128, 128
      %37 = vsyncadd [#allocation6], %s36
      %s39 = sshll.u32 [#allocation7], 4
      %s40 = int_to_ptr.vmem [resolvable:$true] %s39
      %42 = dma.hbm_to_vmem [thread:$0]  %s2, 128, %s40, [#allocation6]
    $region13: #{tpu_custom_call.1} parent=1 // pred_fallthru
      _
    // Predicated region
    $region14: #{tpu_custom_call.1} parent=1 // pred_check
      _
    $region15: #{tpu_custom_call.1} parent=1 // pred_check_branch
      %44 = sbr.rel (0) target = $region17
    $region16: #{tpu_custom_call.1} parent=1 // pred_region
      %45 = dma.done [#allocation3], 128
    $region17: #{tpu_custom_call.1} parent=1 // pred_fallthru
      _
    // Predicated region
    $region18: #{tpu_custom_call.1} parent=1 // pred_check
      _
    $region19: #{tpu_custom_call.1} parent=1 // pred_check_branch
      %47 = sbr.rel (0) target = $region21
    $region20: #{tpu_custom_call.1} parent=1 // pred_region
      %48 = dma.done [#allocation6], 256
    $region21: #{tpu_custom_call.1} parent=1 // pred_fallthru
      _
    // Predicated region
    $region22: #{tpu_custom_call.1} parent=1 // pred_check
      _
    $region23: #{tpu_custom_call.1} parent=1 // pred_check_branch
      %50 = sbr.rel (0) target = $region25
    $region24: #{tpu_custom_call.1} parent=1 // pred_region
      %51 = dma.done [#allocation6], 128
    $region25: #{tpu_custom_call.1} parent=1 // pred_fallthru
      _
    %v52 = vld [vmem:[#allocation2] sm:$0xff]
    %v53 = vld [vmem:[#allocation5] sm:$0xff]
    %v54 = vld [vmem:[#allocation5 + $0x8] sm:$0x3]
    %vm55 = vcmask 80896
    %v57 = vsel %vm55, %v52, 0
    %vm59 = vcmask 1041408
    %v61 = vsel %vm59, %v54, 0
    %63 = vmatprep.subr.mxu0 0.0
    %64 = vmatpush1.msra.mxu0 %v53
    %65 = vmatprep.subr.mxu0 0.0
    %66 = vmatpush1.msra.mxu0 %v61
    %67 = vmatprep.subr.mxu0 0.0
    %68 = vmatpush1.msra.mxu0 0.0
    %69 = vmatprep.subr.mxu0 0.0
    %70 = vmatpush1.msra.mxu0 0.0
    %71 = vmatprep.subr.mxu0 0.0
    %72 = vmatpush1.msra.mxu0 0.0
    %73 = vmatprep.subr.mxu0 0.0
    %74 = vmatpush1.msra.mxu0 0.0
    %75 = vmatprep.subr.mxu0 0.0
    %76 = vmatpush1.msra.mxu0 0.0
    %77 = vmatprep.subr.mxu0 0.0
    %78 = vmatpush1.msra.mxu0 0.0
    %79 = vmatprep.subr.mxu0 0.0
    %80 = vmatpush1.msra.mxu0 0.0
    %81 = vmatprep.subr.mxu0 0.0
    %82 = vmatpush1.msra.mxu0 0.0
    %83 = vmatprep.subr.mxu0 0.0
    %84 = vmatpush1.msra.mxu0 0.0
    %85 = vmatprep.subr.mxu0 0.0
    %86 = vmatpush1.msra.mxu0 0.0
    %87 = vmatprep.subr.mxu0 0.0
    %88 = vmatpush1.msra.mxu0 0.0
    %89 = vmatprep.subr.mxu0 0.0
    %90 = vmatpush1.msra.mxu0 0.0
    %91 = vmatprep.subr.mxu0 0.0
    %92 = vmatpush1.msra.mxu0 0.0
    %93 = vmatprep.subr.mxu0 0.0
    %94 = vmatpush1.msra.mxu0 0.0
    %95 = vmatprep.subr.mxu0 0.0
    %96 = vmatpush1.msra.mxu0 0.0
    %97 = vmatprep.subr.mxu0 0.0
    %98 = vmatpush1.msra.mxu0 0.0
    %99 = vmatprep.subr.mxu0 0.0
    %100 = vmatpush1.msra.mxu0 0.0
    %101 = vmatprep.subr.mxu0 0.0
    %102 = vmatpush1.msra.mxu0 0.0
    %103 = vmatprep.subr.mxu0 0.0
    %104 = vmatpush1.msra.mxu0 0.0
    %105 = vmatprep.subr.mxu0 0.0
    %106 = vmatpush1.msra.mxu0 0.0
    %107 = vmatprep.subr.mxu0 0.0
    %108 = vmatpush1.msra.mxu0 0.0
    %109 = vmatprep.subr.mxu0 0.0
    %110 = vmatpush1.msra.mxu0 0.0
    %111 = vmatprep.subr.mxu0 0.0
    %112 = vmatpush1.msra.mxu0 0.0
    %113 = vmatprep.subr.mxu0 0.0
    %114 = vmatpush1.msra.mxu0 0.0
    %115 = vmatprep.subr.mxu0 0.0
    %116 = vmatpush1.msra.mxu0 0.0
    %117 = vmatprep.subr.mxu0 0.0
    %118 = vmatpush1.msra.mxu0 0.0
    %119 = vmatprep.subr.mxu0 0.0
    %120 = vmatpush1.msra.mxu0 0.0
    %121 = vmatprep.subr.mxu0 0.0
    %122 = vmatpush1.msra.mxu0 0.0
    %123 = vmatprep.subr.mxu0 0.0
    %124 = vmatpush1.msra.mxu0 0.0
    %125 = vmatprep.subr.mxu0 0.0
    %126 = vmatpush1.msra.mxu0 0.0
    %127 = vmatprep.mubr.f32.mxu0 0.0
    %128 = vmatmul.mubr.f32.gmra.mrb[0].mxu0 %v57
    %v129 = vpop.f32.mrb[0].mxu0
    %v130 = vadd.f32 0.0, %v129
    %v131 = vpop.f32.mrb[0].mxu0
    %132 = vdwg.mxu0
    %v133 = vld [vmem:[#allocation7] sm:$0x1f]
    %v134 = vrot.slane %v130, 4
    %v135 = vadd.f32 %v130, %v134
    %v136 = vrot.slane %v135, 2
    %v137 = vadd.f32 %v135, %v136
    %v138 = vrot.slane %v137, 1
    %v139 = vadd.f32 %v137, %v138
    %v140 = vrcp.pop 8.0
    %v141 = vmul.f32 %v139, %v140
    %v142 = vsub.f32 %v130, %v141
    %v143 = vmul.f32 %v142, %v142
    %v144 = vrot.slane %v143, 4
    %v145 = vadd.f32 %v143, %v144
    %v146 = vrot.slane %v145, 2
    %v147 = vadd.f32 %v145, %v146
    %v148 = vrot.slane %v147, 1
    %v149 = vadd.f32 %v147, %v148
    %v150 = vmul.f32 %v149, %v140
    %v151 = vadd.f32 %v150, 1e-05
    %v152 = vrsqrt.pop %v151
    %v153 = vmul.f32 %v133, %v152
    %v154 = vlaneseq
    %v155 = vshrl.u32 %v154, 7
    %v156 = vsub.s32 0, %v155
    %v157 = vrot.slane %v153, %v156
    %v158 = vmul.f32 %v142, %v157
    %v159 = vlaneseq
    %v160 = vshrl.u32 %v159, 7
    %v161 = vsub.s32 1, %v160
    %v162 = vrot.slane %v133, %v161
    %v163 = vadd.f32 %v158, %v162
    %v164 = vmax.f32 %v163, 0.0
    %v166 = vrot.slane %v133, 2
    %168 = vmatprep.subr.mxu0 0.0
    %169 = vmatpush1.xpose.msra.mxu0 %v164
    %170 = vmatprep.subr.mxu0 0.0
    %171 = vmatpush1.xpose.msra.mxu0 0.0
    %172 = vmatprep.subr.mxu0 0.0
    %173 = vmatpush1.xpose.msra.mxu0 0.0
    %174 = vmatprep.subr.mxu0 0.0
    %175 = vmatpush1.xpose.msra.mxu0 0.0
    %176 = vmatprep.subr.mxu0 0.0
    %177 = vmatpush1.xpose.msra.mxu0 0.0
    %178 = vmatprep.subr.mxu0 0.0
    %179 = vmatpush1.xpose.msra.mxu0 0.0
    %180 = vmatprep.subr.mxu0 0.0
    %181 = vmatpush1.xpose.msra.mxu0 0.0
    %182 = vmatprep.subr.mxu0 0.0
    %183 = vmatpush1.xpose.msra.mxu0 0.0
    %184 = vmatprep.subr.mxu0 0.0
    %185 = vmatpush1.xpose.msra.mxu0 0.0
    %186 = vmatprep.subr.mxu0 0.0
    %187 = vmatpush1.xpose.msra.mxu0 0.0
    %188 = vmatprep.subr.mxu0 0.0
    %189 = vmatpush1.xpose.msra.mxu0 0.0
    %190 = vmatprep.subr.mxu0 0.0
    %191 = vmatpush1.xpose.msra.mxu0 0.0
    %192 = vmatprep.subr.mxu0 0.0
    %193 = vmatpush1.xpose.msra.mxu0 0.0
    %194 = vmatprep.subr.mxu0 0.0
    %195 = vmatpush1.xpose.msra.mxu0 0.0
    %196 = vmatprep.subr.mxu0 0.0
    %197 = vmatpush1.xpose.msra.mxu0 0.0
    %198 = vmatprep.subr.mxu0 0.0
    %199 = vmatpush1.xpose.msra.mxu0 0.0
    %200 = vmatprep.subr.mxu0 0.0
    %201 = vmatpush1.xpose.msra.mxu0 0.0
    %202 = vmatprep.subr.mxu0 0.0
    %203 = vmatpush1.xpose.msra.mxu0 0.0
    %204 = vmatprep.subr.mxu0 0.0
    %205 = vmatpush1.xpose.msra.mxu0 0.0
    %206 = vmatprep.subr.mxu0 0.0
    %207 = vmatpush1.xpose.msra.mxu0 0.0
    %208 = vmatprep.subr.mxu0 0.0
    %209 = vmatpush1.xpose.msra.mxu0 0.0
    %210 = vmatprep.subr.mxu0 0.0
    %211 = vmatpush1.xpose.msra.mxu0 0.0
    %212 = vmatprep.subr.mxu0 0.0
    %213 = vmatpush1.xpose.msra.mxu0 0.0
    %214 = vmatprep.subr.mxu0 0.0
    %215 = vmatpush1.xpose.msra.mxu0 0.0
    %216 = vmatprep.subr.mxu0 0.0
    %217 = vmatpush1.xpose.msra.mxu0 0.0
    %218 = vmatprep.subr.mxu0 0.0
    %219 = vmatpush1.xpose.msra.mxu0 0.0
    %220 = vmatprep.subr.mxu0 0.0
    %221 = vmatpush1.xpose.msra.mxu0 0.0
    %222 = vmatprep.subr.mxu0 0.0
    %223 = vmatpush1.xpose.msra.mxu0 0.0
    %224 = vmatprep.subr.mxu0 0.0
    %225 = vmatpush1.xpose.msra.mxu0 0.0
    %226 = vmatprep.subr.mxu0 0.0
    %227 = vmatpush1.xpose.msra.mxu0 0.0
    %228 = vmatprep.subr.mxu0 0.0
    %229 = vmatpush1.xpose.msra.mxu0 0.0
    %230 = vmatprep.subr.mxu0 0.0
    %231 = vmatpush1.xpose.msra.mxu0 0.0
    %232 = vmatprep.mubr.f32.mxu0 0.0
    %233 = vmatmul.mubr.f32.gmra.mrb[0].mxu0 %v166
    %v234 = vpop.f32.mrb[0].mxu0
    %v235 = vadd.f32 0.0, %v234
    %v236 = vpop.f32.mrb[0].mxu0
    %237 = vdwg.mxu0
    %238 = vrot.lane.b32.xlu0 %v133, 127
    %v239 = vpop.permute.xlu0 %238
    %v241 = vsub.f32 %v133, %v239
    %v243 = vrot.slane %v235, 1
    %v245 = vsub.f32 %v235, %v243
    %247 = vset.pattern.permute.xlu0 0
    %248 = vperm.xlu0 %247, %v241
    %v249 = vpop.permute.xlu0 %248
    %v250 = vrot.slane %v249, 4
    %v252 = vadd.f32 %v245, %v250
    %v253 = vsub.f32 0.0, %v252
    %v254 = vmul.f32 %v253, 1.442695
    %v255 = vpow.pop %v254
    %v256 = vadd.f32 %v255, 1.0
    %v257 = vrcp.pop %v256
    %v258 = vmul.f32 1.0, %v257
    %v259 = vsub.f32 1.0, %v258
    %v261 = vrot.slane %v259, 7
    %vm263 = vcmask 1040384
    %v264 = vsel %vm263, %v258, %v261
    %vm265 = vcmask 58368
    %266 = vst.msk [vmem:[#allocation8] sm:$0x3] %vm265, %v264
    // Predicated region
    $region26: #{tpu_custom_call.1} parent=1 // pred_check
      _
    $region27: #{tpu_custom_call.1} parent=1 // pred_check_branch
      %268 = sbr.rel (0) target = $region29
    $region28: #{tpu_custom_call.1} parent=1 // pred_region
      %s270 = ssub.s32 32, 32
      %271 = vsyncadd [#allocation4], %s270
      %s273 = sshll.u32 [#allocation8], 4
      %s274 = int_to_ptr.vmem [resolvable:$true] %s273
      %276 = dma.vmem_to_hbm [thread:$0]  %s274, 32, %s3, [#allocation4]
    $region29: #{tpu_custom_call.1} parent=1 // pred_fallthru
      _
    // Predicated region
    $region30: #{tpu_custom_call.1} parent=1 // pred_check
      _
    $region31: #{tpu_custom_call.1} parent=1 // pred_check_branch
      %278 = sbr.rel (0) target = $region33
    $region32: #{tpu_custom_call.1} parent=1 // pred_region
      %279 = dma.done [#allocation4], 32
    $region33: #{tpu_custom_call.1} parent=1 // pred_fallthru
      _
    %280 = vsyncpa [#allocation3], 1
    %281 = vsyncpa [#allocation6], 1
    %282 = vsyncpa [#allocation4], 1

</llo_original>
